<compile_context>
chip_gen: v7x
topology: tpu7x:2x2x1
jax: 0.10.0
libtpu: 0.0.40
codegen_flags: <defaults>
</compile_context>

<pallas_src>
import functools

import numpy as np
import jax
import jax.numpy as jnp
from jax import lax
from jax.experimental import pallas as pl
from jax.experimental.pallas import tpu as pltpu


# ---------------------------------------------------------------------------
# hardware / convention queries (trace-time safe, conservative fallbacks)
# ---------------------------------------------------------------------------
@functools.lru_cache(maxsize=None)
def _vmem_capacity_bytes():
    try:
        info = pltpu.get_tpu_info()
        cap = int(getattr(info, "vmem_capacity_bytes", 0) or 0)
        if cap > 0:
            return cap
    except Exception:
        pass
    return 64 * 1024 * 1024        # conservative default: v7x per-TC VMEM


def _probe_low_half_is_index0():
    # Which half of a uint32 lands at index 0 when XLA bitcasts 32b -> 16b?
    # Used so the in-kernel bf16 packing always matches the wrapper's view.
    try:
        v = lax.bitcast_convert_type(
            jnp.array([0x00020001], dtype=jnp.uint32), jnp.uint16)
        return int(np.asarray(v)[0, 0]) == 1
    except Exception:
        return True


_LOW_HALF_FIRST = _probe_low_half_is_index0()


# ---------------------------------------------------------------------------
# Path A: stacked-tap matmul, lane axis = flattened pixels
# ---------------------------------------------------------------------------
def _up_matmul_kernel(x_ref, w_ref, b_ref, o_ref):
    # x_ref: (C_in, TP)   activation tile, pixels on the lane axis
    # w_ref: (TN, C_in)   stacked-tap weight tile (rows ordered (co, ki, kj))
    # b_ref: (TN, 1)      per-row bias, f32
    # o_ref: (TN, TP)     lane-dense output tile
    acc = jnp.dot(w_ref[...], x_ref[...], preferred_element_type=jnp.float32)
    o_ref[...] = (acc + b_ref[...]).astype(o_ref.dtype)


def _choose_flat_tiles(Q, HW, C_in, in_bytes, out_bytes, pixel_tile, cout_tile,
                       vmem_budget):
    # Pixel (lane) tile: always a multiple of 128, never above the target.
    tp = min(pixel_tile, max(128, pl.cdiv(HW, 128) * 128))
    tp = max(128, (tp // 128) * 128)
    # Row tile: keep all 4*C_out rows resident when they fit -> x streamed once.
    tn = Q if Q <= cout_tile else max(8, (cout_tile // 8) * 8)

    def need(tn_, tp_):            # double-buffered blocks
        return 2 * (C_in * tp_ * in_bytes + tn_ * C_in * in_bytes + tn_ * 4
                    + tn_ * tp_ * out_bytes)

    while need(tn, tp) > vmem_budget and (tp > 128 or tn > 128):
        if tp > 128:
            tp = max(128, ((tp // 2) // 128) * 128)
        else:
            tn = max(128, ((tn // 2) // 8) * 8)
    return tn, tp, need(tn, tp)


def _up_flat(x, weight, bias, out_dtype, mm_dtype, pixel_tile, cout_tile):
    N, C_in, H, W = x.shape
    C_out = weight.shape[1]
    HW = H * W
    Q = 4 * C_out                                    # stacked (co, ki, kj) rows

    x3 = x.reshape(N, C_in, HW)                      # free reshape of NCHW
    if x3.dtype != mm_dtype:
        x3 = x3.astype(mm_dtype)
    # rows ordered (co, ki, kj):  w_slab[co*4 + ki*2 + kj, ci]
    w_slab = jnp.transpose(weight, (1, 2, 3, 0)).reshape(Q, C_in).astype(mm_dtype)
    b_slab = jnp.repeat(bias.astype(jnp.float32), 4).reshape(Q, 1)

    in_bytes = jnp.dtype(mm_dtype).itemsize
    out_bytes = jnp.dtype(out_dtype).itemsize
    budget = (_vmem_capacity_bytes() * 3) // 4       # leave compiler headroom
    TN, TP, need = _choose_flat_tiles(Q, HW, C_in, in_bytes, out_bytes,
                                      pixel_tile, cout_tile, budget)
    n_ct = pl.cdiv(Q, TN)
    grid = (N, n_ct, pl.cdiv(HW, TP))                # all axes independent

    vmem_limit = int(min(max(need * 13 // 10, 16 * 1024 * 1024), budget))
    cost = pl.CostEstimate(
        flops=2 * N * HW * C_in * Q,
        transcendentals=0,
        bytes_accessed=int(n_ct * N * C_in * HW * in_bytes   # x re-read / row tile
                           + Q * C_in * in_bytes + Q * 4
                           + N * Q * HW * out_bytes),
    )

    out_flat = pl.pallas_call(
        _up_matmul_kernel,
        out_shape=jax.ShapeDtypeStruct((N, Q, HW), out_dtype),
        grid_spec=pltpu.PrefetchScalarGridSpec(
            num_scalar_prefetch=0,
            grid=grid,
            in_specs=[
                # activations: batch-squeezed (C_in, TP) tiles straight from NCHW
                pl.BlockSpec((None, C_in, TP), lambda b, c, p: (b, 0, p)),
                # weights / bias: constant along the innermost pixel axis
                pl.BlockSpec((TN, C_in), lambda b, c, p: (c, 0)),
                pl.BlockSpec((TN, 1), lambda b, c, p: (c, 0)),
            ],
            out_specs=pl.BlockSpec((None, TN, TP), lambda b, c, p: (b, c, p)),
        ),
        compiler_params=pltpu.CompilerParams(
            dimension_semantics=("parallel", "parallel", "parallel"),
            vmem_limit_bytes=vmem_limit,
        ),
        cost_estimate=cost,
    )(x3, w_slab, b_slab)

    # (N, 4*C_out, H*W) -> (N, C_out, 2H, 2W); rows are (co, ki, kj) so the
    # permute is local to the trailing (2, 2, H, W) dims of each (n, co) slice.
    y = out_flat.reshape(N, C_out, 2, 2, H, W)       # [n, co, ki, kj, i, j]
    y = jnp.transpose(y, (0, 1, 4, 2, 5, 3))         # [n, co, i, ki, j, kj]
    return y.reshape(N, C_out, 2 * H, 2 * W)


# ---------------------------------------------------------------------------
# Path B: bf16 output with the 2x2 interleave fused into the kernel
# ---------------------------------------------------------------------------
def _up_packed_kernel(x_ref, w_ref, b_ref, o_ref, *, rows, low_first):
    # x_ref: (C_in, TI, W)        input rows of this tile
    # w_ref: (2, 2, C_out, C_in)  taps, resident for the whole grid
    # b_ref: (C_out, 1)           f32 bias
    # o_ref: (C_out, 2*TI, W)     uint32; each lane packs the (2j, 2j+1) bf16 pair
    bvec = b_ref[...]
    hi_mask = jnp.uint32(0xFFFF0000)
    for t in range(rows):
        xt = x_ref[:, t, :]                                       # (C_in, W)
        for ki in range(2):
            v0 = jnp.dot(w_ref[ki, 0], xt,
                         preferred_element_type=jnp.float32) + bvec
            v1 = jnp.dot(w_ref[ki, 1], xt,
                         preferred_element_type=jnp.float32) + bvec
            # round to bf16 (hardware RNE), grab the 16-bit patterns from the
            # top half of the f32 representation (no 16-bit integer ops needed)
            p0 = pltpu.bitcast(v0.astype(jnp.bfloat16).astype(jnp.float32),
                               jnp.uint32)
            p1 = pltpu.bitcast(v1.astype(jnp.bfloat16).astype(jnp.float32),
                               jnp.uint32)
            if low_first:          # column 2j lives in the low half-word
                packed = (p0 >> 16) | (p1 & hi_mask)
            else:
                packed = (p1 >> 16) | (p0 & hi_mask)
            o_ref[:, 2 * t + ki, :] = packed


def _up_packed(x, weight, bias, mm_dtype):
    N, C_in, H, W = x.shape
    C_out = weight.shape[1]

    if mm_dtype is not None and x.dtype != jnp.dtype(mm_dtype):
        x = x.astype(mm_dtype)
    w4 = jnp.transpose(weight, (2, 3, 1, 0))          # (2, 2, C_out, C_in)
    if mm_dtype is not None:
        w4 = w4.astype(mm_dtype)
    b2 = bias.astype(jnp.float32).reshape(C_out, 1)

    in_bytes = jnp.dtype(x.dtype).itemsize
    TI = 8 if H >= 8 else H                           # legal sublane tile (8 | full)
    budget = (_vmem_capacity_bytes() * 3) // 4
    need = 2 * (C_in * TI * W * in_bytes              # x block
                + 4 * C_out * C_in * in_bytes         # resident taps
                + C_out * 4                           # bias
                + C_out * 2 * TI * W * 4)             # packed u32 output block
    if need > budget:
        return None                                   # caller falls back to path A

    grid = (N, pl.cdiv(H, TI))
    vmem_limit = int(min(max(need * 13 // 10, 16 * 1024 * 1024), budget))
    cost = pl.CostEstimate(
        flops=2 * N * H * W * C_in * 4 * C_out,
        transcendentals=0,
        bytes_accessed=int(N * C_in * H * W * in_bytes
                           + 4 * C_out * C_in * in_bytes + C_out * 4
                           + N * C_out * 2 * H * W * 4),
    )

    kern = functools.partial(_up_packed_kernel, rows=TI,
                             low_first=_LOW_HALF_FIRST)
    out_u32 = pl.pallas_call(
        kern,
        out_shape=jax.ShapeDtypeStruct((N, C_out, 2 * H, W), jnp.uint32),
        grid_spec=pltpu.PrefetchScalarGridSpec(
            num_scalar_prefetch=0,
            grid=grid,
            in_specs=[
                pl.BlockSpec((None, C_in, TI, W), lambda n, r: (n, 0, r, 0)),
                pl.BlockSpec((2, 2, C_out, C_in), lambda n, r: (0, 0, 0, 0)),
                pl.BlockSpec((C_out, 1), lambda n, r: (0, 0)),
            ],
            out_specs=pl.BlockSpec((None, C_out, 2 * TI, W),
                                   lambda n, r: (n, 0, r, 0)),
        ),
        compiler_params=pltpu.CompilerParams(
            dimension_semantics=("parallel", "parallel"),
            vmem_limit_bytes=vmem_limit,
        ),
        cost_estimate=cost,
    )(x, w4, b2)

    # free epilogue: view the packed u32 columns as adjacent bf16 pairs
    y = lax.bitcast_convert_type(out_u32, jnp.bfloat16)  # (N, C_out, 2H, W, 2)
    return y.reshape(N, C_out, 2 * H, 2 * W)


# ---------------------------------------------------------------------------
# public entry point
# ---------------------------------------------------------------------------
def up_forward(x_nchw, weight, bias, *, compute_dtype=None, out_dtype=None,
               pixel_tile=None, cout_tile=None, fuse_interleave=True):
    """ConvTranspose2d(in_ch, in_ch, 2, stride=2) forward.

    x_nchw : (N, C_in, H, W)
    weight : (C_in, C_out, 2, 2)   (PyTorch ConvTranspose2d layout)
    bias   : (C_out,)
    returns: (N, C_out, 2H, 2W) in `out_dtype` (default: x.dtype)

    out_dtype=jnp.bfloat16 selects the fused-interleave path (no XLA epilogue
    transpose); compute_dtype=jnp.bfloat16 additionally halves input traffic.
    Accumulation is float32 in all paths.
    """
    out_dtype = jnp.dtype(x_nchw.dtype) if out_dtype is None else jnp.dtype(out_dtype)
    mm_dtype = (jnp.dtype(compute_dtype) if compute_dtype is not None
                else jnp.dtype(x_nchw.dtype))

    if fuse_interleave and out_dtype == jnp.dtype(jnp.bfloat16):
        y = _up_packed(x_nchw, weight, bias,
                       None if compute_dtype is None else mm_dtype)
        if y is not None:
            return y

    cap = _vmem_capacity_bytes()
    if pixel_tile is None:
        # bigger tiles on 128-MiB parts (v5e/v6e); conservative on 64-MiB v7x
        pixel_tile = 1024 if cap >= (96 << 20) else 512
    if cout_tile is None:
        cout_tile = 2048
    return _up_flat(x_nchw, weight, bias, out_dtype, mm_dtype,
                    pixel_tile, cout_tile)


# ---------------------------------------------------------------------------
# reference + self-test
# ---------------------------------------------------------------------------
def _reference_deconv(x, weight, bias):
    """Direct numpy implementation of ConvTranspose2d(k=2, stride=2)."""
    x = np.asarray(x, dtype=np.float32)
    w = np.asarray(weight, dtype=np.float32)
    b = np.asarray(bias, dtype=np.float32)
    N, C_in, H, W = x.shape
    C_out = w.shape[1]
    y = np.einsum("ncij,cokl->noikjl", x, w).reshape(N, C_out, 2 * H, 2 * W)
    return y + b[None, :, None, None]


if __name__ == "__main__":
    key = jax.random.PRNGKey(0)
    k_x, k_w, k_b = jax.random.split(key, 3)

    N, C_in, H, W = 2, 8, 16, 16
    C_out = C_in          # module uses ConvTranspose2d(in_ch, in_ch, 2, stride=2)

    x = jax.random.normal(k_x, (N, C_in, H, W), dtype=jnp.float32)
    weight = jax.random.normal(k_w, (C_in, C_out, 2, 2), dtype=jnp.float32) * 0.1
    bias = jax.random.normal(k_b, (C_out,), dtype=jnp.float32) * 0.1

    ref = _reference_deconv(x, weight, bias)

    # exact float32 path (path A: matmul kernel + XLA epilogue interleave)
    y = jax.block_until_ready(jax.jit(up_forward)(x, weight, bias))
    assert y.shape == (N, C_out, 2 * H, 2 * W), y.shape
    np.testing.assert_allclose(np.asarray(y), ref, rtol=1e-5, atol=1e-5)

    # fused bf16 path (path B: 2x2 interleave packed inside the kernel)
    up_bf16 = jax.jit(functools.partial(up_forward, out_dtype=jnp.bfloat16))
    y16 = jax.block_until_ready(up_bf16(x, weight, bias))
    assert y16.shape == (N, C_out, 2 * H, 2 * W), y16.shape
    assert y16.dtype == jnp.bfloat16, y16.dtype
    np.testing.assert_allclose(np.asarray(y16, dtype=np.float32), ref,
                               rtol=2e-2, atol=2e-2)

    print("KERNEL_OK")
</pallas_src>

<mosaic_0001>
module attributes {stable_mosaic.version = 11 : i64} {
  func.func @_up_matmul_kernel(%arg0: i32, %arg1: i32, %arg2: i32, %arg3: memref<1x8x256xf32, #tpu.memory_space<vmem>>, %arg4: memref<32x8xf32, #tpu.memory_space<vmem>>, %arg5: memref<32x1xf32, #tpu.memory_space<vmem>>, %arg6: memref<1x32x256xf32, #tpu.memory_space<vmem>>) attributes {dimension_semantics = [#tpu.dimension_semantics<parallel>, #tpu.dimension_semantics<parallel>, #tpu.dimension_semantics<parallel>], iteration_bounds = array<i64: 2, 1, 1>, scalar_prefetch = 0 : i64, scratch_operands = 0 : i64, tpu.core_type = #tpu.core_type<tc>, window_params = [{transform_indices = @transform_0, window_bounds = array<i64: 1, 8, 256>}, {transform_indices = @transform_1, window_bounds = array<i64: 32, 8>}, {transform_indices = @transform_2, window_bounds = array<i64: 32, 1>}, {transform_indices = @transform_3, window_bounds = array<i64: 1, 32, 256>}]} {
    %c0 = arith.constant 0 : index
    %c0_0 = arith.constant 0 : index
    %0 = vector.load %arg4[%c0, %c0_0] : memref<32x8xf32, #tpu.memory_space<vmem>>, vector<32x8xf32>
    %c0_1 = arith.constant 0 : index
    %c0_2 = arith.constant 0 : index
    %c0_3 = arith.constant 0 : index
    %1 = vector.load %arg3[%c0_1, %c0_2, %c0_3] : memref<1x8x256xf32, #tpu.memory_space<vmem>>, vector<1x8x256xf32>
    %2 = vector.shape_cast %1 : vector<1x8x256xf32> to vector<8x256xf32>
    %cst = arith.constant dense<0.000000e+00> : vector<32x256xf32>
    %3 = tpu.matmul %0, %2, %cst {dimension_numbers = #tpu.dot_dimension_numbers<[1], [0], [0], [1], [0, 0, 1, 1], [], []>} : vector<32x8xf32>, vector<8x256xf32>, vector<32x256xf32> -> vector<32x256xf32>
    %c0_4 = arith.constant 0 : index
    %c0_5 = arith.constant 0 : index
    %4 = vector.load %arg5[%c0_4, %c0_5] : memref<32x1xf32, #tpu.memory_space<vmem>>, vector<32x1xf32>
    %5 = vector.broadcast %4 : vector<32x1xf32> to vector<32x256xf32>
    %6 = arith.addf %3, %5 : vector<32x256xf32>
    %c0_6 = arith.constant 0 : index
    %c0_7 = arith.constant 0 : index
    %c0_8 = arith.constant 0 : index
    %7 = vector.load %arg6[%c0_6, %c0_7, %c0_8] : memref<1x32x256xf32, #tpu.memory_space<vmem>>, vector<1x32x256xf32>
    %8 = vector.shape_cast %7 : vector<1x32x256xf32> to vector<32x256xf32>
    %9 = vector.shape_cast %6 : vector<32x256xf32> to vector<1x32x256xf32>
    tpu.vector_store %arg6[%c0_6, %c0_7, %c0_8], %9 {strides = array<i32>} : memref<1x32x256xf32, #tpu.memory_space<vmem>>, vector<1x32x256xf32>,
    return
  }
  func.func @transform_0(%arg0: i32, %arg1: i32, %arg2: i32) -> (i32, i32, i32) {
    %c0_i32 = arith.constant 0 : i32
    %c0_i32_0 = arith.constant 0 : i32
    return %arg0, %c0_i32, %arg2 : i32, i32, i32
  }
  func.func @transform_1(%arg0: i32, %arg1: i32, %arg2: i32) -> (i32, i32) {
    %c0_i32 = arith.constant 0 : i32
    %c0_i32_0 = arith.constant 0 : i32
    return %arg1, %c0_i32 : i32, i32
  }
  func.func @transform_2(%arg0: i32, %arg1: i32, %arg2: i32) -> (i32, i32) {
    %c0_i32 = arith.constant 0 : i32
    %c0_i32_0 = arith.constant 0 : i32
    return %arg1, %c0_i32 : i32, i32
  }
  func.func @transform_3(%arg0: i32, %arg1: i32, %arg2: i32) -> (i32, i32, i32) {
    %c0_i32 = arith.constant 0 : i32
    return %arg0, %arg1, %arg2 : i32, i32, i32
  }
}

</mosaic_0001>

<llo_original>
// kernel: up_forward.1
$region0: #{up_forward.1}
  #allocation0 [shape = 'u32[]', space=smem, size = 0x4, offset = 0x4, fixed_abs, tag = 'smem constant byte address 0x4 - core index']
  #allocation1 [shape = 'u32[144,128]{1,0:T(1,128)}', space=vmem, size = 0x12000, scoped, tag = 'internal scratch']
  %s0 = inlined_call_operand.vmem [shape: f32[2,8,256], index: 0, kind: input, shape index: {}]
  %s1 = inlined_call_operand.vmem [shape: f32[32,8], index: 1, kind: input, shape index: {}]
  %s2 = inlined_call_operand.vmem [shape: f32[32,1], index: 2, kind: input, shape index: {}]
  %s3 = inlined_call_operand.vmem [shape: f32[2,32,256], index: 3, kind: output, shape index: {}]
  %s4 = sld [smem:[#allocation0]]
  $region45: #{up_forward.1} parent=0
    _
  %s6 = ssub.s32 1, %s4
  %s7 = scalar_select 0, %s6, %s4
  loop: start=0, step=1, limit=4
  $region2: #{up_forward.1} parent=0 // loop_pre_header
    _
  $region3: #{up_forward.1} parent=0 // loop_header
    %s9 = sphi 0, %s13
    %p10 = scmp.ge.s32.totalorder %s9, 4
    %s16 = sphi 0, %s35
    %s17 = sphi 0, %s31
    %s18 = sphi 0, %s27
    %s19 = sphi 0, %s16
    %s20 = sphi 0, %s17
    %s21 = sphi 0, %s18
    %s22 = sphi 0, %s19
    %s23 = sphi 0, %s20
    %s24 = sphi 0, %s21
    %s40 = sphi 0, %s42
    %s43 = sphi 0, %s40
    %s44 = sphi 0, %s43
    %s60 = sphi 0, %s44
    %s66 = sphi 0, %s68
    %s69 = sphi 0, %s66
    %s70 = sphi 0, %s69
    %s86 = sphi 0, %s70
    %s92 = sphi 0, %s94
    %s95 = sphi 0, %s92
    %s96 = sphi 0, %s95
    %s112 = sphi 0, %s96
    %s122 = sphi 0, %s124
    %s125 = sphi 0, %s122
    %s126 = sphi 0, %s125
    %s142 = sphi 0, %s126
  $region4: #{up_forward.1} parent=0 // loop_header_branch
    %12 = sbr.rel (%p10) target = $region8
  $region5: #{up_forward.1} parent=0 // loop_body
    %s14 = ssub.s32 %s9, 1
    %s15 = ssub.s32 %s9, 2
    %s25 = sadd.s32 1, %s18
    %p26 = scmp.ge.s32.totalorder %s25, 1
    %s27 = scalar_select %p26, 0, %s25
    %s28 = sadd.s32 1, %s17
    %s29 = scalar_select %p26, %s28, %s17
    %p30 = scmp.ge.s32.totalorder %s29, 1
    %s31 = scalar_select %p30, 0, %s29
    %s32 = sadd.s32 1, %s16
    %s33 = scalar_select %p30, %s32, %s16
    %p34 = scmp.ge.s32.totalorder %s33, 2
    %s35 = scalar_select %p34, 0, %s33
    %s36 = ssub.s32 %s16, %s35
    %s37 = ssub.s32 %s18, %s27
    %s38 = sor.u32 %s36, %s37
    %p39 = scmp.eq.s32.totalorder %s38, 0
    %s41 = sadd.s32 %s40, 1
    %s42 = scalar_select %p39, %s40, %s41
    %p45 = pneg %p39
    %p46 = scmp.eq.s32.totalorder %s9, 1
    %p47 = por %p45, %p46
    %p48 = scmp.ne.s32.totalorder %s40, %s43
    %p49 = scmp.eq.s32.totalorder %s9, 0
    %p50 = por %p48, %p49
    %p51 = scmp.ne.s32.totalorder %s40, %s43
    %p52 = scmp.eq.s32.totalorder %s14, 1
    %p53 = por %p51, %p52
    %p54 = scmp.ne.s32.totalorder %s43, %s44
    %p55 = scmp.eq.s32.totalorder %s14, 0
    %p56 = por %p54, %p55
    %p57 = scmp.ne.s32.totalorder %s43, %s44
    %p58 = scmp.eq.s32.totalorder %s15, 1
    %p59 = por %p57, %p58
    %p61 = scmp.ne.s32.totalorder %s44, %s60
    %p62 = scmp.eq.s32.totalorder %s15, 0
    %p63 = por %p61, %p62
    %s64 = ssub.s32 %s17, %s31
    %p65 = scmp.eq.s32.totalorder %s64, 0
    %s67 = sadd.s32 %s66, 1
    %s68 = scalar_select %p65, %s66, %s67
    %p71 = pneg %p65
    %p72 = scmp.eq.s32.totalorder %s9, 1
    %p73 = por %p71, %p72
    %p74 = scmp.ne.s32.totalorder %s66, %s69
    %p75 = scmp.eq.s32.totalorder %s9, 0
    %p76 = por %p74, %p75
    %p77 = scmp.ne.s32.totalorder %s66, %s69
    %p78 = scmp.eq.s32.totalorder %s14, 1
    %p79 = por %p77, %p78
    %p80 = scmp.ne.s32.totalorder %s69, %s70
    %p81 = scmp.eq.s32.totalorder %s14, 0
    %p82 = por %p80, %p81
    %p83 = scmp.ne.s32.totalorder %s69, %s70
    %p84 = scmp.eq.s32.totalorder %s15, 1
    %p85 = por %p83, %p84
    %p87 = scmp.ne.s32.totalorder %s70, %s86
    %p88 = scmp.eq.s32.totalorder %s15, 0
    %p89 = por %p87, %p88
    %s90 = ssub.s32 %s17, %s31
    %p91 = scmp.eq.s32.totalorder %s90, 0
    %s93 = sadd.s32 %s92, 1
    %s94 = scalar_select %p91, %s92, %s93
    %p97 = pneg %p91
    %p98 = scmp.eq.s32.totalorder %s9, 1
    %p99 = por %p97, %p98
    %p100 = scmp.ne.s32.totalorder %s92, %s95
    %p101 = scmp.eq.s32.totalorder %s9, 0
    %p102 = por %p100, %p101
    %p103 = scmp.ne.s32.totalorder %s92, %s95
    %p104 = scmp.eq.s32.totalorder %s14, 1
    %p105 = por %p103, %p104
    %p106 = scmp.ne.s32.totalorder %s95, %s96
    %p107 = scmp.eq.s32.totalorder %s14, 0
    %p108 = por %p106, %p107
    %p109 = scmp.ne.s32.totalorder %s95, %s96
    %p110 = scmp.eq.s32.totalorder %s15, 1
    %p111 = por %p109, %p110
    %p113 = scmp.ne.s32.totalorder %s96, %s112
    %p114 = scmp.eq.s32.totalorder %s15, 0
    %p115 = por %p113, %p114
    %s116 = ssub.s32 %s16, %s35
    %s117 = ssub.s32 %s17, %s31
    %s118 = sor.u32 %s116, %s117
    %s119 = ssub.s32 %s18, %s27
    %s120 = sor.u32 %s118, %s119
    %p121 = scmp.eq.s32.totalorder %s120, 0
    %s123 = sadd.s32 %s122, 1
    %s124 = scalar_select %p121, %s122, %s123
    %p127 = pneg %p121
    %p128 = scmp.eq.s32.totalorder %s9, 1
    %p129 = por %p127, %p128
    %p130 = scmp.ne.s32.totalorder %s122, %s125
    %p131 = scmp.eq.s32.totalorder %s9, 0
    %p132 = por %p130, %p131
    %p133 = scmp.ne.s32.totalorder %s122, %s125
    %p134 = scmp.eq.s32.totalorder %s14, 1
    %p135 = por %p133, %p134
    %p136 = scmp.ne.s32.totalorder %s125, %s126
    %p137 = scmp.eq.s32.totalorder %s14, 0
    %p138 = por %p136, %p137
    %p139 = scmp.ne.s32.totalorder %s125, %s126
    %p140 = scmp.eq.s32.totalorder %s15, 1
    %p141 = por %p139, %p140
    %p143 = scmp.ne.s32.totalorder %s126, %s142
    %p144 = scmp.eq.s32.totalorder %s15, 0
    %p145 = por %p143, %p144
    %p146 = scmp.le.s32.totalorder 1, %s9
    %p147 = scmp.lt.s32.totalorder %s9, 3
    %p148 = pnand %p146, %p147
    %p149 = pneg %p148
    // Predicated region
    $region9: #{up_forward.1} parent=5 // pred_check
      _
    $region10: #{up_forward.1} parent=5 // pred_check_branch
      %151 = sbr.rel (%p148) target = $region12
    $region11: #{up_forward.1} parent=5 // pred_region
      %s152 = ssub.s32 %s9, 1
      // Predicated region
      $region13: #{up_forward.1} parent=11 // pred_check
        %p153 = pneg %p82
      $region14: #{up_forward.1} parent=11 // pred_check_branch
        %155 = sbr.rel (%p153) target = $region16
      $region15: #{up_forward.1} parent=11 // pred_region
        %s156 = smul.u32 4, %s20
        %p157 = scmp.lt.s32.totalorder %s156, 3
        %s158 = scalar_select %p157, %s156, 3
        %s159 = smul.addr %s158, 8
        %s160 = scalar_lea.vmem %s1, %s159
        %s161 = smul.u32 4, %s20
      $region16: #{up_forward.1} parent=11 // pred_fallthru
        _
      // Predicated region
      $region17: #{up_forward.1} parent=11 // pred_check
        %p162 = pneg %p108
      $region18: #{up_forward.1} parent=11 // pred_check_branch
        %164 = sbr.rel (%p162) target = $region20
      $region19: #{up_forward.1} parent=11 // pred_region
        %s165 = smul.u32 4, %s20
        %p166 = scmp.lt.s32.totalorder %s165, 3
        %s167 = scalar_select %p166, %s165, 3
        %s168 = smul.addr %s167, 8
        %s169 = scalar_lea.vmem %s2, %s168
        %s170 = smul.u32 4, %s20
      $region20: #{up_forward.1} parent=11 // pred_fallthru
        _
    $region12: #{up_forward.1} parent=5 // pred_fallthru
      _
    %p171 = scmp.lt.s32.totalorder %s9, 2
    // Predicated region
    $region21: #{up_forward.1} parent=5 // pred_check
      %p172 = pneg %p171
    $region22: #{up_forward.1} parent=5 // pred_check_branch
      %174 = sbr.rel (%p172) target = $region24
    $region23: #{up_forward.1} parent=5 // pred_region
      // Predicated region
      $region25: #{up_forward.1} parent=23 // pred_check
        %p175 = pneg %p50
      $region26: #{up_forward.1} parent=23 // pred_check_branch
        %177 = sbr.rel (%p175) target = $region28
      $region27: #{up_forward.1} parent=23 // pred_region
        %s178 = smul.u32 2, %s18
        %p179 = scmp.lt.s32.totalorder %s16, 1
        %s180 = scalar_select %p179, %s16, 1
        %p181 = scmp.lt.s32.totalorder %s178, 1
        %s182 = scalar_select %p181, %s178, 1
        %s183 = smul.addr %s180, 2
        %s184 = sadd.s32 %s182, %s183
        %s185 = smul.addr %s184, 8
        %s186 = scalar_lea.vmem %s0, %s185
        %s187 = smul.u32 2, %s18
      $region28: #{up_forward.1} parent=23 // pred_fallthru
        _
    $region24: #{up_forward.1} parent=5 // pred_fallthru
      _
    %p188 = scmp.le.s32.totalorder 1, %s9
    %p189 = scmp.lt.s32.totalorder %s9, 3
    %p190 = pnand %p188, %p189
    %p191 = pneg %p190
    // Predicated region
    $region29: #{up_forward.1} parent=5 // pred_check
      _
    $region30: #{up_forward.1} parent=5 // pred_check_branch
      %193 = sbr.rel (%p190) target = $region32
    $region31: #{up_forward.1} parent=5 // pred_region
      %s194 = ssub.s32 %s9, 1
      %s195 = smul.u32 2, %s21
      %p196 = scmp.lt.s32.totalorder %s19, 1
      %s197 = scalar_select %p196, %s19, 1
      %p198 = scmp.lt.s32.totalorder %s195, 1
      %s199 = scalar_select %p198, %s195, 1
      %s200 = smul.addr %s197, 2
      %s201 = sadd.s32 %s199, %s200
      %s202 = smul.addr %s201, 8
      %s203 = scalar_lea.vmem %s0, %s202
      %p204 = pneg %p56
      %p205 = pneg %p53
      %s206 = smul.u32 4, %s20
      %p207 = scmp.lt.s32.totalorder %s206, 3
      %s208 = scalar_select %p207, %s206, 3
      %s209 = smul.addr %s208, 8
      %s210 = scalar_lea.vmem %s1, %s209
      %p211 = pneg %p82
      %p212 = pneg %p79
      %s213 = smul.u32 4, %s20
      %p214 = scmp.lt.s32.totalorder %s213, 3
      %s215 = scalar_select %p214, %s213, 3
      %s216 = smul.addr %s215, 8
      %s217 = scalar_lea.vmem %s2, %s216
      %p218 = pneg %p108
      %p219 = pneg %p105
      %p220 = pneg %p138
      %p221 = pneg %p135
      %s222 = smul.u32 4, %s20
      %s223 = smul.u32 2, %s21
      %p224 = scmp.lt.s32.totalorder %s19, 1
      %s225 = scalar_select %p224, %s19, 1
      %p226 = scmp.lt.s32.totalorder %s222, 3
      %s227 = scalar_select %p226, %s222, 3
      %p228 = scmp.lt.s32.totalorder %s223, 1
      %s229 = scalar_select %p228, %s223, 1
      %s230 = smul.addr %s227, 2
      %s231 = sadd.s32 %s229, %s230
      %s232 = smul.addr %s225, 8
      %s233 = sadd.s32 %s231, %s232
      %s234 = smul.addr %s233, 8
      %s235 = scalar_lea.vmem %s3, %s234
      %s236 = smul.u32 2, %s21
      %p237 = scmp.lt.s32.totalorder %s19, 1
      %s238 = scalar_select %p237, %s19, 1
      %p239 = scmp.lt.s32.totalorder %s236, 1
      %s240 = scalar_select %p239, %s236, 1
      %s241 = smul.addr %s238, 2
      %s242 = sadd.s32 %s240, %s241
      %s243 = smul.addr %s242, 8
      %s244 = scalar_lea.vmem %s0, %s243
      %s245 = smul.u32 2, %s21
      %s246 = smul.u32 4, %s20
      %p247 = scmp.lt.s32.totalorder %s246, 3
      %s248 = scalar_select %p247, %s246, 3
      %s249 = smul.addr %s248, 8
      %s250 = scalar_lea.vmem %s1, %s249
      %s251 = smul.u32 4, %s20
      %s252 = smul.u32 4, %s20
      %p253 = scmp.lt.s32.totalorder %s252, 3
      %s254 = scalar_select %p253, %s252, 3
      %s255 = smul.addr %s254, 8
      %s256 = scalar_lea.vmem %s2, %s255
      %s257 = smul.u32 4, %s20
      %s258 = smul.u32 4, %s20
      %s259 = smul.u32 2, %s21
      %p260 = scmp.lt.s32.totalorder %s19, 1
      %s261 = scalar_select %p260, %s19, 1
      %p262 = scmp.lt.s32.totalorder %s258, 3
      %s263 = scalar_select %p262, %s258, 3
      %p264 = scmp.lt.s32.totalorder %s259, 1
      %s265 = scalar_select %p264, %s259, 1
      %s266 = smul.addr %s263, 2
      %s267 = sadd.s32 %s265, %s266
      %s268 = smul.addr %s261, 8
      %s269 = sadd.s32 %s267, %s268
      %s270 = smul.addr %s269, 8
      %s271 = scalar_lea.vmem %s3, %s270
      %s272 = smul.u32 4, %s20
      %s273 = smul.u32 2, %s21
      %v274 = vld [vmem:[%s250] sm:$0xff]
      %v275 = vld [vmem:[%s250 + $0x8] sm:$0xff]
      %v276 = vld [vmem:[%s250 + $0x10] sm:$0xff]
      %v277 = vld [vmem:[%s250 + $0x18] sm:$0xff]
      %v278 = vld [vmem:[%s244] sm:$0xff]
      %v279 = vld [vmem:[%s244 + $0x8] sm:$0xff]
      %v280 = vld [vmem:[%s256] sm:$0xff]
      %v281 = vld [vmem:[%s256 + $0x8] sm:$0xff]
      %v282 = vld [vmem:[%s256 + $0x10] sm:$0xff]
      %v283 = vld [vmem:[%s256 + $0x18] sm:$0xff]
      %285 = vset.pattern.permute.xlu0 0
      %286 = vperm.xlu0 %285, %v280
      %v287 = vpop.permute.xlu0 %286
      %290 = vset.pattern.permute.xlu0 0
      %291 = vperm.xlu0 %290, %v281
      %v292 = vpop.permute.xlu0 %291
      %295 = vset.pattern.permute.xlu0 0
      %296 = vperm.xlu0 %295, %v282
      %v297 = vpop.permute.xlu0 %296
      %300 = vset.pattern.permute.xlu0 0
      %301 = vperm.xlu0 %300, %v283
      %v302 = vpop.permute.xlu0 %301
      %vm304 = vcmask 64512
      %v306 = vsel %vm304, %v274, 0
      %v309 = vsel %vm304, %v275, 0
      %v312 = vsel %vm304, %v276, 0
      %v315 = vsel %vm304, %v277, 0
      %317 = vmatprep.subr.mxu0 %v279
      %318 = vmatpush1.msra.mxu0 %v278
      %319 = vmatprep.subr.mxu0 0.0
      %320 = vmatpush1.msra.mxu0 0.0
      %321 = vmatprep.subr.mxu0 0.0
      %322 = vmatpush1.msra.mxu0 0.0
      %323 = vmatprep.subr.mxu0 0.0
      %324 = vmatpush1.msra.mxu0 0.0
      %325 = vmatprep.subr.mxu0 0.0
      %326 = vmatpush1.msra.mxu0 0.0
      %327 = vmatprep.subr.mxu0 0.0
      %328 = vmatpush1.msra.mxu0 0.0
      %329 = vmatprep.subr.mxu0 0.0
      %330 = vmatpush1.msra.mxu0 0.0
      %331 = vmatprep.subr.mxu0 0.0
      %332 = vmatpush1.msra.mxu0 0.0
      %333 = vmatprep.subr.mxu0 0.0
      %334 = vmatpush1.msra.mxu0 0.0
      %335 = vmatprep.subr.mxu0 0.0
      %336 = vmatpush1.msra.mxu0 0.0
      %337 = vmatprep.subr.mxu0 0.0
      %338 = vmatpush1.msra.mxu0 0.0
      %339 = vmatprep.subr.mxu0 0.0
      %340 = vmatpush1.msra.mxu0 0.0
      %341 = vmatprep.subr.mxu0 0.0
      %342 = vmatpush1.msra.mxu0 0.0
      %343 = vmatprep.subr.mxu0 0.0
      %344 = vmatpush1.msra.mxu0 0.0
      %345 = vmatprep.subr.mxu0 0.0
      %346 = vmatpush1.msra.mxu0 0.0
      %347 = vmatprep.subr.mxu0 0.0
      %348 = vmatpush1.msra.mxu0 0.0
      %349 = vmatprep.subr.mxu0 0.0
      %350 = vmatpush1.msra.mxu0 0.0
      %351 = vmatprep.subr.mxu0 0.0
      %352 = vmatpush1.msra.mxu0 0.0
      %353 = vmatprep.subr.mxu0 0.0
      %354 = vmatpush1.msra.mxu0 0.0
      %355 = vmatprep.subr.mxu0 0.0
      %356 = vmatpush1.msra.mxu0 0.0
      %357 = vmatprep.subr.mxu0 0.0
      %358 = vmatpush1.msra.mxu0 0.0
      %359 = vmatprep.subr.mxu0 0.0
      %360 = vmatpush1.msra.mxu0 0.0
      %361 = vmatprep.subr.mxu0 0.0
      %362 = vmatpush1.msra.mxu0 0.0
      %363 = vmatprep.subr.mxu0 0.0
      %364 = vmatpush1.msra.mxu0 0.0
      %365 = vmatprep.subr.mxu0 0.0
      %366 = vmatpush1.msra.mxu0 0.0
      %367 = vmatprep.subr.mxu0 0.0
      %368 = vmatpush1.msra.mxu0 0.0
      %369 = vmatprep.subr.mxu0 0.0
      %370 = vmatpush1.msra.mxu0 0.0
      %371 = vmatprep.subr.mxu0 0.0
      %372 = vmatpush1.msra.mxu0 0.0
      %373 = vmatprep.subr.mxu0 0.0
      %374 = vmatpush1.msra.mxu0 0.0
      %375 = vmatprep.subr.mxu0 0.0
      %376 = vmatpush1.msra.mxu0 0.0
      %377 = vmatprep.subr.mxu0 0.0
      %378 = vmatpush1.msra.mxu0 0.0
      %379 = vmatprep.subr.mxu0 0.0
      %380 = vmatpush1.msra.mxu0 0.0
      %381 = vmatprep.mubr.f32.mxu0 0.0
      %382 = vmatmul.mubr.f32.gmra.mrb[0].mxu0 %v306
      %v383 = vpop.f32.mrb[0].mxu0
      %v384 = vadd.f32 %v287, %v383
      %v385 = vpop.f32.mrb[0].mxu0
      %v386 = vadd.f32 %v287, %v385
      %387 = vmatprep.mubr.f32.mxu0 0.0
      %388 = vmatmul.mubr.f32.gmra.mrb[0].mxu0 %v309
      %v389 = vpop.f32.mrb[0].mxu0
      %v390 = vadd.f32 %v292, %v389
      %v391 = vpop.f32.mrb[0].mxu0
      %v392 = vadd.f32 %v292, %v391
      %393 = vmatprep.mubr.f32.mxu0 0.0
      %394 = vmatmul.mubr.f32.gmra.mrb[0].mxu0 %v312
      %v395 = vpop.f32.mrb[0].mxu0
      %v396 = vadd.f32 %v297, %v395
      %v397 = vpop.f32.mrb[0].mxu0
      %v398 = vadd.f32 %v297, %v397
      %399 = vmatprep.mubr.f32.mxu0 0.0
      %400 = vmatmul.mubr.f32.gmra.mrb[0].mxu0 %v315
      %v401 = vpop.f32.mrb[0].mxu0
      %v402 = vadd.f32 %v302, %v401
      %v403 = vpop.f32.mrb[0].mxu0
      %v404 = vadd.f32 %v302, %v403
      %405 = vdwg.mxu0
      %406 = vst [vmem:[%s271] sm:$0xff] %v384
      %407 = vst [vmem:[%s271 + $0x8] sm:$0xff] %v386
      %408 = vst [vmem:[%s271 + $0x10] sm:$0xff] %v390
      %409 = vst [vmem:[%s271 + $0x18] sm:$0xff] %v392
      %410 = vst [vmem:[%s271 + $0x20] sm:$0xff] %v396
      %411 = vst [vmem:[%s271 + $0x28] sm:$0xff] %v398
      %412 = vst [vmem:[%s271 + $0x30] sm:$0xff] %v402
      %413 = vst [vmem:[%s271 + $0x38] sm:$0xff] %v404
      %s414 = smul.u32 4, %s20
      %s415 = smul.u32 2, %s21
      %p416 = scmp.lt.s32.totalorder %s19, 1
      %s417 = scalar_select %p416, %s19, 1
      %p418 = scmp.lt.s32.totalorder %s414, 3
      %s419 = scalar_select %p418, %s414, 3
      %p420 = scmp.lt.s32.totalorder %s415, 1
      %s421 = scalar_select %p420, %s415, 1
      %s422 = smul.addr %s419, 2
      %s423 = sadd.s32 %s421, %s422
      %s424 = smul.addr %s417, 8
      %s425 = sadd.s32 %s423, %s424
      %s426 = smul.addr %s425, 8
      %s427 = scalar_lea.vmem %s3, %s426
      // Predicated region
      $region33: #{up_forward.1} parent=31 // pred_check
        %p428 = pneg %p135
      $region34: #{up_forward.1} parent=31 // pred_check_branch
        %430 = sbr.rel (%p428) target = $region36
      $region35: #{up_forward.1} parent=31 // pred_region
        %s431 = smul.u32 4, %s20
        %s432 = smul.u32 2, %s21
      $region36: #{up_forward.1} parent=31 // pred_fallthru
        _
    $region32: #{up_forward.1} parent=5 // pred_fallthru
      _
    %p433 = scmp.le.s32.totalorder 2, %s9
    // Predicated region
    $region37: #{up_forward.1} parent=5 // pred_check
      %p434 = pneg %p433
    $region38: #{up_forward.1} parent=5 // pred_check_branch
      %436 = sbr.rel (%p434) target = $region40
    $region39: #{up_forward.1} parent=5 // pred_region
      %s437 = ssub.s32 %s9, 2
      // Predicated region
      $region41: #{up_forward.1} parent=39 // pred_check
        %p438 = pneg %p141
      $region42: #{up_forward.1} parent=39 // pred_check_branch
        %440 = sbr.rel (%p438) target = $region44
      $region43: #{up_forward.1} parent=39 // pred_region
        %s441 = smul.u32 4, %s23
        %s442 = smul.u32 2, %s24
        %p443 = scmp.lt.s32.totalorder %s22, 1
        %s444 = scalar_select %p443, %s22, 1
        %p445 = scmp.lt.s32.totalorder %s441, 3
        %s446 = scalar_select %p445, %s441, 3
        %p447 = scmp.lt.s32.totalorder %s442, 1
        %s448 = scalar_select %p447, %s442, 1
        %s449 = smul.addr %s446, 2
        %s450 = sadd.s32 %s448, %s449
        %s451 = smul.addr %s444, 8
        %s452 = sadd.s32 %s450, %s451
        %s453 = smul.addr %s452, 8
        %s454 = scalar_lea.vmem %s3, %s453
      $region44: #{up_forward.1} parent=39 // pred_fallthru
        _
    $region40: #{up_forward.1} parent=5 // pred_fallthru
      _
  $region6: #{up_forward.1} parent=0 // loop_footer
    %s13 = sadd.s32 1, %s9
  $region7: #{up_forward.1} parent=0 // loop_footer_branch
    %8 = sbr.rel target = $region3
  $region8: #{up_forward.1} parent=0 // loop_exit
    _

</llo_original>
